<compile_context>
chip_gen: v7x
topology: tpu7x:2x2x1
jax: 0.10.0
libtpu: 0.0.40
codegen_flags: <defaults>
</compile_context>

<pallas_src>
import jax
import jax.numpy as jnp
from jax import lax
from jax.experimental import pallas as pl
from jax.experimental.pallas import tpu as pltpu

_LANES = 128
_MAX_TILE_ROWS = 512  # 512*128*4B = 256 KiB per f32 block; ~1 MiB double-buffered


def _fused_ce_kernel(wts_ref, n_ref, d_ref, t_ref, out_ref, acc_ref):
    # Grid: (L, n_tiles).  Per step:
    #   wts_ref: (L,) f32 in SMEM   positive-class weight per label
    #   n_ref:   (1,) i32 in SMEM   number of valid samples N
    #   d_ref:   (1, tile_rows, 128) f32   d = x[:,1] - x[:,0], lane-dense
    #   t_ref:   (1, tile_rows, 128) i32   raw targets (padding value ignored)
    #   out_ref: (1, 1, 128) f32    per-label loss broadcast across lanes
    #   acc_ref: (2, 128) f32 VMEM  row 0: per-lane num, row 1: per-lane den
    l_idx = pl.program_id(0)
    n_idx = pl.program_id(1)

    @pl.when(n_idx == 0)
    def _():
        acc_ref[...] = jnp.zeros_like(acc_ref)

    d = d_ref[0]                                   # (tile_rows, 128)
    t = t_ref[0]                                   # (tile_rows, 128) int32
    tile_rows = d.shape[0]

    # Validity mask: global flat sample index = (tile_row0 + row) * 128 + lane.
    row0 = n_idx * tile_rows
    rows = lax.broadcasted_iota(jnp.int32, (tile_rows, _LANES), 0)
    lanes = lax.broadcasted_iota(jnp.int32, (tile_rows, _LANES), 1)
    valid = (row0 + rows) * _LANES + lanes < n_ref[0]

    # Per-sample class weight: wt_l for target==1, else 1.0; 0 for padding.
    # TODO(synk): targets outside {0, 1} silently act as class 0 (weight 1)
    # instead of raising like PyTorch.
    wt_l = wts_ref[l_idx]
    is_pos = t == 1
    w = jnp.where(valid, jnp.where(is_pos, wt_l, 1.0), 0.0)

    # C == 2 closed form: -log_softmax(x)[t] = softplus(d) if t==0 else
    # softplus(-d), softplus(z) = max(z, 0) + log(1 + exp(-|z|)).
    z = jnp.where(is_pos, -d, d)
    neglogp = jnp.maximum(z, 0.0) + jnp.log(1.0 + jnp.exp(-jnp.abs(z)))

    acc_ref[0:1, :] += jnp.sum(w * neglogp, axis=0, keepdims=True)
    acc_ref[1:2, :] += jnp.sum(w, axis=0, keepdims=True)

    @pl.when(n_idx == pl.num_programs(1) - 1)
    def _():
        num = jnp.sum(acc_ref[0:1, :])
        den = jnp.sum(acc_ref[1:2, :])
        # den == 0 (e.g. N == 0) yields NaN, matching PyTorch's weighted mean.
        out_ref[...] = jnp.full(out_ref.shape, num / den, dtype=jnp.float32)


@jax.jit
def _multilabel_ce(logits, targets, wts):
    """Fused weighted binary CE for all labels.

    logits:  (L, N, 2) float
    targets: (L, N)    int32 in {0, 1}
    wts:     (L,)      float32 positive-class weights (class-0 weight is 1)
    returns: (L,)      float32 per-label losses
    """
    L, N, C = logits.shape
    assert C == 2, "MultiLabelCrossEntropyLoss uses 2 classes per label"

    # Only ship the logit difference + raw targets (halves HBM traffic).
    d = (logits[..., 1] - logits[..., 0]).astype(jnp.float32)      # (L, N)
    t = targets.astype(jnp.int32)                                  # (L, N)

    # Dense (rows, 128) tiling of the sample axis; rows multiple of 8.
    rows_needed = -(-N // _LANES)
    tile_rows = min(_MAX_TILE_ROWS, ((rows_needed + 7) // 8) * 8)
    rows_pad = -(-rows_needed // tile_rows) * tile_rows
    n_pad = rows_pad * _LANES
    n_tiles = rows_pad // tile_rows

    pad = n_pad - N
    if pad:
        d = jnp.pad(d, ((0, 0), (0, pad)))
        t = jnp.pad(t, ((0, 0), (0, pad)))
    d = d.reshape(L, rows_pad, _LANES)
    t = t.reshape(L, rows_pad, _LANES)

    n_arr = jnp.full((1,), N, dtype=jnp.int32)
    wts_f = wts.astype(jnp.float32)

    # TODO(synk): if N is tiny and L is large, pack 8 labels per grid step
    # (labels on the sublane axis) to amortize the ~0.35us/step overhead.
    out = pl.pallas_call(
        _fused_ce_kernel,
        out_shape=jax.ShapeDtypeStruct((L, 1, _LANES), jnp.float32),
        grid_spec=pltpu.PrefetchScalarGridSpec(
            num_scalar_prefetch=2,
            grid=(L, n_tiles),
            in_specs=[
                pl.BlockSpec((1, tile_rows, _LANES),
                             lambda l, n, wts_r, n_r: (l, n, 0)),
                pl.BlockSpec((1, tile_rows, _LANES),
                             lambda l, n, wts_r, n_r: (l, n, 0)),
            ],
            out_specs=pl.BlockSpec((1, 1, _LANES),
                                   lambda l, n, wts_r, n_r: (l, 0, 0)),
            scratch_shapes=[pltpu.VMEM((2, _LANES), jnp.float32)],
        ),
        compiler_params=pltpu.CompilerParams(
            dimension_semantics=("parallel", "arbitrary")),
    )(wts_f, n_arr, d, t)
    return out[:, 0, 0]                                            # (L,)


class MultiLabelCrossEntropyLoss:
    """JAX/Pallas port: one weighted binary CE per label, fused in one kernel.

    Assumes every (output, target) pair in a call has the same batch size,
    which lets all labels share a single stacked pallas_call.
    """

    def __init__(self, wts):
        self.wts = jnp.asarray([float(w) for w in wts], dtype=jnp.float32)

    def __call__(self, outputs_list, targets_list):
        logits = jnp.stack([o.astype(jnp.float32) for o in outputs_list], axis=0)
        targets = jnp.stack([t.astype(jnp.int32) for t in targets_list], axis=0)
        losses = _multilabel_ce(logits, targets, self.wts)
        return [losses[i] for i in range(losses.shape[0])]


if __name__ == "__main__":
    key = jax.random.PRNGKey(0)

    wts = [2.0, 0.5, 1.5]          # per-label positive-class weights
    N, C = 8, 2                    # batch of 8, binary classification per label
    loss_fn = MultiLabelCrossEntropyLoss(wts)

    outputs_list = []
    targets_list = []
    for _ in range(len(wts)):
        key, k1, k2 = jax.random.split(key, 3)
        outputs_list.append(jax.random.normal(k1, (N, C), dtype=jnp.float32))
        targets_list.append(jax.random.randint(k2, (N,), 0, C, dtype=jnp.int32))

    losses = loss_fn(outputs_list, targets_list)
    losses = [jax.block_until_ready(l) for l in losses]

    # Pure-JAX reference of weighted CE (weighted-mean reduction).
    def ref_ce(x, t, w):
        logp = jax.nn.log_softmax(x, axis=-1)
        picked = logp[jnp.arange(x.shape[0]), t]
        wt = w[t]
        return -jnp.sum(wt * picked) / jnp.sum(wt)

    for l, x, t, wt in zip(losses, outputs_list, targets_list, wts):
        cw = jnp.array([1.0, wt], dtype=jnp.float32)
        r = ref_ce(x, t, cw)
        assert jnp.allclose(l, r, rtol=1e-5, atol=1e-5), (l, r)

    print("KERNEL_OK")
</pallas_src>

<mosaic_0001>
module attributes {stable_mosaic.version = 11 : i64} {
  func.func @_fused_ce_kernel(%arg0: i32, %arg1: i32, %arg2: memref<3xf32, #tpu.memory_space<smem>>, %arg3: memref<1xi32, #tpu.memory_space<smem>>, %arg4: memref<1x8x128xf32, #tpu.memory_space<vmem>>, %arg5: memref<1x8x128xi32, #tpu.memory_space<vmem>>, %arg6: memref<1x1x128xf32, #tpu.memory_space<vmem>>, %arg7: memref<2x128xf32, #tpu.memory_space<vmem>>) attributes {dimension_semantics = [#tpu.dimension_semantics<parallel>, #tpu.dimension_semantics<arbitrary>], iteration_bounds = array<i64: 3, 1>, scalar_prefetch = 2 : i64, scratch_operands = 1 : i64, tpu.core_type = #tpu.core_type<tc>, window_params = [{transform_indices = @transform_0, window_bounds = array<i64: 1, 8, 128>}, {transform_indices = @transform_1, window_bounds = array<i64: 1, 8, 128>}, {transform_indices = @transform_2, window_bounds = array<i64: 1, 1, 128>}]} {
    %c0_i32 = arith.constant 0 : i32
    %0 = arith.cmpi eq, %arg1, %c0_i32 : i32
    %1 = arith.extui %0 : i1 to i32
    %c0_i32_0 = arith.constant 0 : i32
    %2 = arith.cmpi ne, %1, %c0_i32_0 : i32
    scf.if %2 {
      %cst_23 = arith.constant 0.000000e+00 : f32
      %54 = vector.broadcast %cst_23 : f32 to vector<2x128xf32>
      %c0_24 = arith.constant 0 : index
      %c0_25 = arith.constant 0 : index
      %55 = vector.load %arg7[%c0_24, %c0_25] : memref<2x128xf32, #tpu.memory_space<vmem>>, vector<2x128xf32>
      tpu.vector_store %arg7[%c0_24, %c0_25], %54 {strides = array<i32>} : memref<2x128xf32, #tpu.memory_space<vmem>>, vector<2x128xf32>,
    } else {
    }
    %c0 = arith.constant 0 : index
    %c0_1 = arith.constant 0 : index
    %c0_2 = arith.constant 0 : index
    %3 = vector.load %arg4[%c0, %c0_1, %c0_2] : memref<1x8x128xf32, #tpu.memory_space<vmem>>, vector<1x8x128xf32>
    %4 = vector.shape_cast %3 : vector<1x8x128xf32> to vector<8x128xf32>
    %c0_3 = arith.constant 0 : index
    %c0_4 = arith.constant 0 : index
    %c0_5 = arith.constant 0 : index
    %5 = vector.load %arg5[%c0_3, %c0_4, %c0_5] : memref<1x8x128xi32, #tpu.memory_space<vmem>>, vector<1x8x128xi32>
    %6 = vector.shape_cast %5 : vector<1x8x128xi32> to vector<8x128xi32>
    %c8_i32 = arith.constant 8 : i32
    %7 = arith.muli %arg1, %c8_i32 : i32
    %8 = tpu.iota {dimensions = array<i32: 0>} : vector<8x128xi32>
    %9 = tpu.iota {dimensions = array<i32: 1>} : vector<8x128xi32>
    %10 = vector.broadcast %7 : i32 to vector<8x128xi32>
    %11 = arith.addi %10, %8 : vector<8x128xi32>
    %c128_i32 = arith.constant 128 : i32
    %12 = vector.broadcast %c128_i32 : i32 to vector<8x128xi32>
    %13 = arith.muli %11, %12 : vector<8x128xi32>
    %14 = arith.addi %13, %9 : vector<8x128xi32>
    %c0_6 = arith.constant 0 : index
    %15 = memref.load %arg3[%c0_6] : memref<1xi32, #tpu.memory_space<smem>>
    %16 = vector.broadcast %15 : i32 to vector<8x128xi32>
    %17 = arith.cmpi slt, %14, %16 : vector<8x128xi32>
    %18 = arith.index_cast %arg0 : i32 to index
    %19 = memref.load %arg2[%18] : memref<3xf32, #tpu.memory_space<smem>>
    %c1_i32 = arith.constant 1 : i32
    %20 = vector.broadcast %c1_i32 : i32 to vector<8x128xi32>
    %21 = arith.cmpi eq, %6, %20 : vector<8x128xi32>
    %cst = arith.constant 1.000000e+00 : f32
    %22 = vector.broadcast %19 : f32 to vector<8x128xf32>
    %23 = vector.broadcast %cst : f32 to vector<8x128xf32>
    %24 = arith.select %21, %22, %23 : vector<8x128xi1>, vector<8x128xf32>
    %cst_7 = arith.constant 0.000000e+00 : f32
    %25 = vector.broadcast %cst_7 : f32 to vector<8x128xf32>
    %26 = arith.select %17, %24, %25 : vector<8x128xi1>, vector<8x128xf32>
    %cst_8 = arith.constant 0.000000e+00 : f32
    %27 = vector.broadcast %cst_8 : f32 to vector<8x128xf32>
    %28 = arith.subf %27, %4 : vector<8x128xf32>
    %29 = arith.select %21, %28, %4 : vector<8x128xi1>, vector<8x128xf32>
    %cst_9 = arith.constant 0.000000e+00 : f32
    %30 = vector.broadcast %cst_9 : f32 to vector<8x128xf32>
    %31 = arith.maximumf %29, %30 : vector<8x128xf32>
    %32 = math.absf %29 : vector<8x128xf32>
    %cst_10 = arith.constant 0.000000e+00 : f32
    %33 = vector.broadcast %cst_10 : f32 to vector<8x128xf32>
    %34 = arith.subf %33, %32 : vector<8x128xf32>
    %35 = math.exp %34 : vector<8x128xf32>
    %cst_11 = arith.constant 1.000000e+00 : f32
    %36 = vector.broadcast %cst_11 : f32 to vector<8x128xf32>
    %37 = arith.addf %36, %35 : vector<8x128xf32>
    %38 = math.log %37 : vector<8x128xf32>
    %39 = arith.addf %31, %38 : vector<8x128xf32>
    %c0_12 = arith.constant 0 : index
    %c0_13 = arith.constant 0 : index
    %40 = vector.load %arg7[%c0_12, %c0_13] : memref<2x128xf32, #tpu.memory_space<vmem>>, vector<1x128xf32>
    %41 = arith.mulf %26, %39 : vector<8x128xf32>
    %cst_14 = arith.constant dense<0.000000e+00> : vector<128xf32>
    %42 = vector.multi_reduction <add>, %41, %cst_14 [0] : vector<8x128xf32> to vector<128xf32>
    %43 = vector.shape_cast %42 : vector<128xf32> to vector<1x128xf32>
    %44 = arith.addf %40, %43 : vector<1x128xf32>
    %c0_15 = arith.constant 0 : index
    %c0_16 = arith.constant 0 : index
    %45 = vector.load %arg7[%c0_15, %c0_16] : memref<2x128xf32, #tpu.memory_space<vmem>>, vector<1x128xf32>
    tpu.vector_store %arg7[%c0_15, %c0_16], %44 {strides = array<i32>} : memref<2x128xf32, #tpu.memory_space<vmem>>, vector<1x128xf32>,
    %c1 = arith.constant 1 : index
    %c0_17 = arith.constant 0 : index
    %46 = vector.load %arg7[%c1, %c0_17] : memref<2x128xf32, #tpu.memory_space<vmem>>, vector<1x128xf32>
    %cst_18 = arith.constant dense<0.000000e+00> : vector<128xf32>
    %47 = vector.multi_reduction <add>, %26, %cst_18 [0] : vector<8x128xf32> to vector<128xf32>
    %48 = vector.shape_cast %47 : vector<128xf32> to vector<1x128xf32>
    %49 = arith.addf %46, %48 : vector<1x128xf32>
    %c1_19 = arith.constant 1 : index
    %c0_20 = arith.constant 0 : index
    %50 = vector.load %arg7[%c1_19, %c0_20] : memref<2x128xf32, #tpu.memory_space<vmem>>, vector<1x128xf32>
    tpu.vector_store %arg7[%c1_19, %c0_20], %49 {strides = array<i32>} : memref<2x128xf32, #tpu.memory_space<vmem>>, vector<1x128xf32>,
    %c0_i32_21 = arith.constant 0 : i32
    %51 = arith.cmpi eq, %arg1, %c0_i32_21 : i32
    %52 = arith.extui %51 : i1 to i32
    %c0_i32_22 = arith.constant 0 : i32
    %53 = arith.cmpi ne, %52, %c0_i32_22 : i32
    scf.if %53 {
      %c0_23 = arith.constant 0 : index
      %c0_24 = arith.constant 0 : index
      %54 = vector.load %arg7[%c0_23, %c0_24] : memref<2x128xf32, #tpu.memory_space<vmem>>, vector<1x128xf32>
      %55 = vector.shape_cast %54 : vector<1x128xf32> to vector<1x1x128xf32>
      %cst_25 = arith.constant dense<0.000000e+00> : vector<1xf32>
      %56 = vector.multi_reduction <add>, %55, %cst_25 [1, 2] : vector<1x1x128xf32> to vector<1xf32>
      %57 = vector.shape_cast %56 : vector<1xf32> to vector<1x1x1xf32>
      %58 = vector.extract %57[0, 0, 0] : f32 from vector<1x1x1xf32>
      %c1_26 = arith.constant 1 : index
      %c0_27 = arith.constant 0 : index
      %59 = vector.load %arg7[%c1_26, %c0_27] : memref<2x128xf32, #tpu.memory_space<vmem>>, vector<1x128xf32>
      %60 = vector.shape_cast %59 : vector<1x128xf32> to vector<1x1x128xf32>
      %cst_28 = arith.constant dense<0.000000e+00> : vector<1xf32>
      %61 = vector.multi_reduction <add>, %60, %cst_28 [1, 2] : vector<1x1x128xf32> to vector<1xf32>
      %62 = vector.shape_cast %61 : vector<1xf32> to vector<1x1x1xf32>
      %63 = vector.extract %62[0, 0, 0] : f32 from vector<1x1x1xf32>
      %64 = arith.divf %58, %63 : f32
      %65 = vector.broadcast %64 : f32 to vector<1x1x128xf32>
      %c0_29 = arith.constant 0 : index
      %c0_30 = arith.constant 0 : index
      %c0_31 = arith.constant 0 : index
      %66 = vector.load %arg6[%c0_29, %c0_30, %c0_31] : memref<1x1x128xf32, #tpu.memory_space<vmem>>, vector<1x1x128xf32>
      tpu.vector_store %arg6[%c0_29, %c0_30, %c0_31], %65 {strides = array<i32>} : memref<1x1x128xf32, #tpu.memory_space<vmem>>, vector<1x1x128xf32>,
    } else {
    }
    return
  }
  func.func @transform_0(%arg0: i32, %arg1: i32, %arg2: memref<3xf32, #tpu.memory_space<smem>>, %arg3: memref<1xi32, #tpu.memory_space<smem>>) -> (i32, i32, i32) {
    %c0_i32 = arith.constant 0 : i32
    %c0_i32_0 = arith.constant 0 : i32
    return %arg0, %arg1, %c0_i32 : i32, i32, i32
  }
  func.func @transform_1(%arg0: i32, %arg1: i32, %arg2: memref<3xf32, #tpu.memory_space<smem>>, %arg3: memref<1xi32, #tpu.memory_space<smem>>) -> (i32, i32, i32) {
    %c0_i32 = arith.constant 0 : i32
    %c0_i32_0 = arith.constant 0 : i32
    return %arg0, %arg1, %c0_i32 : i32, i32, i32
  }
  func.func @transform_2(%arg0: i32, %arg1: i32, %arg2: memref<3xf32, #tpu.memory_space<smem>>, %arg3: memref<1xi32, #tpu.memory_space<smem>>) -> (i32, i32, i32) {
    %c0_i32 = arith.constant 0 : i32
    %c0_i32_0 = arith.constant 0 : i32
    %c0_i32_1 = arith.constant 0 : i32
    return %arg0, %c0_i32, %c0_i32_0 : i32, i32, i32
  }
}

</mosaic_0001>

<llo_original>
// kernel: _multilabel_ce.1
$region0: #{_multilabel_ce.1}
  #allocation0 [shape = 'u32[]', space=smem, size = 0x4, offset = 0x4, fixed_abs, tag = 'smem constant byte address 0x4 - core index']
  #allocation1 [shape = 'u32[144,128]{1,0:T(1,128)}', space=vmem, size = 0x12000, scoped, tag = 'internal scratch']
  #allocation2 [shape = 'f32[2,128]{1,0:T(2,128)}', space=vmem, size = 0x400, scoped, tag = 'scratch operand']
  #allocation3 [shape = 's32[1]{0}', space=sflag, size = 0x4, scoped, tag = 'scoped memory for _multilabel_ce.1']
  #allocation4 [shape = 'u8[512]{0}', space=smem, size = 0x200, scoped, tag = 'prefetched SMEM operand 0']
  #allocation5 [shape = 's32[1]{0:T(128)S(6)}', space=smem, size = 0x200, scoped, tag = 'prefetched SMEM operand 1']
  %s0 = inlined_call_operand.vmem [shape: f32[3], index: 0, kind: input, shape index: {}]
  %s1 = inlined_call_operand.<no memory space> [shape: s32[1], index: 1, kind: input, shape index: {}]
  %s2 = inlined_call_operand.vmem [shape: f32[3,8,128], index: 2, kind: input, shape index: {}]
  %s3 = inlined_call_operand.vmem [shape: s32[3,8,128], index: 3, kind: input, shape index: {}]
  %s4 = inlined_call_operand.vmem [shape: f32[3,1,128], index: 4, kind: output, shape index: {}]
  %s5 = sld [smem:[#allocation0]]
  $region49: #{_multilabel_ce.1} parent=0
    _
  %s7 = ssub.s32 1, %s5
  %s8 = scalar_select 0, %s7, %s5
  %s9 = sshll.u32 %s0, 4
  %s10 = int_to_ptr.vmem [resolvable:$true] %s9
  %12 = dma.vmem_to_smem %s10, 16, [#allocation4], [#allocation3]
  %13 = sst [smem:[#allocation5]] %s1
  %14 = dma.done [#allocation3], 16
  %15 = sfence
  loop: start=0, step=1, limit=5
  $region2: #{_multilabel_ce.1} parent=0 // loop_pre_header
    _
  $region3: #{_multilabel_ce.1} parent=0 // loop_header
    %s17 = sphi 0, %s21
    %p18 = scmp.ge.s32.totalorder %s17, 5
    %s24 = sphi 0, %s36
    %s25 = sphi 0, %s32
    %s26 = sphi 0, %s24
    %s27 = sphi 0, %s25
    %s28 = sphi 0, %s26
    %s29 = sphi 0, %s27
    %s41 = sphi 0, %s43
    %s44 = sphi 0, %s41
    %s45 = sphi 0, %s44
    %s61 = sphi 0, %s45
    %s69 = sphi 0, %s71
    %s72 = sphi 0, %s69
    %s73 = sphi 0, %s72
    %s89 = sphi 0, %s73
    %s95 = sphi 0, %s97
    %s98 = sphi 0, %s95
    %s99 = sphi 0, %s98
    %s115 = sphi 0, %s99
  $region4: #{_multilabel_ce.1} parent=0 // loop_header_branch
    %20 = sbr.rel (%p18) target = $region8
  $region5: #{_multilabel_ce.1} parent=0 // loop_body
    %s22 = ssub.s32 %s17, 1
    %s23 = ssub.s32 %s17, 2
    %s30 = sadd.s32 1, %s25
    %p31 = scmp.ge.s32.totalorder %s30, 1
    %s32 = scalar_select %p31, 0, %s30
    %s33 = sadd.s32 1, %s24
    %s34 = scalar_select %p31, %s33, %s24
    %p35 = scmp.ge.s32.totalorder %s34, 3
    %s36 = scalar_select %p35, 0, %s34
    %s37 = ssub.s32 %s24, %s36
    %s38 = ssub.s32 %s25, %s32
    %s39 = sor.u32 %s37, %s38
    %p40 = scmp.eq.s32.totalorder %s39, 0
    %s42 = sadd.s32 %s41, 1
    %s43 = scalar_select %p40, %s41, %s42
    %p46 = pneg %p40
    %p47 = scmp.eq.s32.totalorder %s17, 2
    %p48 = por %p46, %p47
    %p49 = scmp.ne.s32.totalorder %s41, %s44
    %p50 = scmp.eq.s32.totalorder %s17, 0
    %p51 = por %p49, %p50
    %p52 = scmp.ne.s32.totalorder %s41, %s44
    %p53 = scmp.eq.s32.totalorder %s22, 2
    %p54 = por %p52, %p53
    %p55 = scmp.ne.s32.totalorder %s44, %s45
    %p56 = scmp.eq.s32.totalorder %s22, 0
    %p57 = por %p55, %p56
    %p58 = scmp.ne.s32.totalorder %s44, %s45
    %p59 = scmp.eq.s32.totalorder %s23, 2
    %p60 = por %p58, %p59
    %p62 = scmp.ne.s32.totalorder %s45, %s61
    %p63 = scmp.eq.s32.totalorder %s23, 0
    %p64 = por %p62, %p63
    %s65 = ssub.s32 %s24, %s36
    %s66 = ssub.s32 %s25, %s32
    %s67 = sor.u32 %s65, %s66
    %p68 = scmp.eq.s32.totalorder %s67, 0
    %s70 = sadd.s32 %s69, 1
    %s71 = scalar_select %p68, %s69, %s70
    %p74 = pneg %p68
    %p75 = scmp.eq.s32.totalorder %s17, 2
    %p76 = por %p74, %p75
    %p77 = scmp.ne.s32.totalorder %s69, %s72
    %p78 = scmp.eq.s32.totalorder %s17, 0
    %p79 = por %p77, %p78
    %p80 = scmp.ne.s32.totalorder %s69, %s72
    %p81 = scmp.eq.s32.totalorder %s22, 2
    %p82 = por %p80, %p81
    %p83 = scmp.ne.s32.totalorder %s72, %s73
    %p84 = scmp.eq.s32.totalorder %s22, 0
    %p85 = por %p83, %p84
    %p86 = scmp.ne.s32.totalorder %s72, %s73
    %p87 = scmp.eq.s32.totalorder %s23, 2
    %p88 = por %p86, %p87
    %p90 = scmp.ne.s32.totalorder %s73, %s89
    %p91 = scmp.eq.s32.totalorder %s23, 0
    %p92 = por %p90, %p91
    %s93 = ssub.s32 %s24, %s36
    %p94 = scmp.eq.s32.totalorder %s93, 0
    %s96 = sadd.s32 %s95, 1
    %s97 = scalar_select %p94, %s95, %s96
    %p100 = pneg %p94
    %p101 = scmp.eq.s32.totalorder %s17, 2
    %p102 = por %p100, %p101
    %p103 = scmp.ne.s32.totalorder %s95, %s98
    %p104 = scmp.eq.s32.totalorder %s17, 0
    %p105 = por %p103, %p104
    %p106 = scmp.ne.s32.totalorder %s95, %s98
    %p107 = scmp.eq.s32.totalorder %s22, 2
    %p108 = por %p106, %p107
    %p109 = scmp.ne.s32.totalorder %s98, %s99
    %p110 = scmp.eq.s32.totalorder %s22, 0
    %p111 = por %p109, %p110
    %p112 = scmp.ne.s32.totalorder %s98, %s99
    %p113 = scmp.eq.s32.totalorder %s23, 2
    %p114 = por %p112, %p113
    %p116 = scmp.ne.s32.totalorder %s99, %s115
    %p117 = scmp.eq.s32.totalorder %s23, 0
    %p118 = por %p116, %p117
    %p119 = scmp.le.s32.totalorder 1, %s17
    %p120 = scmp.lt.s32.totalorder %s17, 4
    %p121 = pnand %p119, %p120
    %p122 = pneg %p121
    // Predicated region
    $region9: #{_multilabel_ce.1} parent=5 // pred_check
      _
    $region10: #{_multilabel_ce.1} parent=5 // pred_check_branch
      %124 = sbr.rel (%p121) target = $region12
    $region11: #{_multilabel_ce.1} parent=5 // pred_region
      %s125 = ssub.s32 %s17, 1
    $region12: #{_multilabel_ce.1} parent=5 // pred_fallthru
      _
    %p126 = scmp.lt.s32.totalorder %s17, 3
    // Predicated region
    $region13: #{_multilabel_ce.1} parent=5 // pred_check
      %p127 = pneg %p126
    $region14: #{_multilabel_ce.1} parent=5 // pred_check_branch
      %129 = sbr.rel (%p127) target = $region16
    $region15: #{_multilabel_ce.1} parent=5 // pred_region
      // Predicated region
      $region17: #{_multilabel_ce.1} parent=15 // pred_check
        %p130 = pneg %p51
      $region18: #{_multilabel_ce.1} parent=15 // pred_check_branch
        %132 = sbr.rel (%p130) target = $region20
      $region19: #{_multilabel_ce.1} parent=15 // pred_region
        %p133 = scmp.lt.s32.totalorder %s24, 2
        %s134 = scalar_select %p133, %s24, 2
        %p135 = scmp.lt.s32.totalorder %s25, 0
        %s136 = scalar_select %p135, %s25, 0
        %s137 = sadd.s32 %s136, %s134
        %s138 = smul.addr %s137, 8
        %s139 = scalar_lea.vmem %s2, %s138
      $region20: #{_multilabel_ce.1} parent=15 // pred_fallthru
        _
      // Predicated region
      $region21: #{_multilabel_ce.1} parent=15 // pred_check
        %p140 = pneg %p79
      $region22: #{_multilabel_ce.1} parent=15 // pred_check_branch
        %142 = sbr.rel (%p140) target = $region24
      $region23: #{_multilabel_ce.1} parent=15 // pred_region
        %p143 = scmp.lt.s32.totalorder %s24, 2
        %s144 = scalar_select %p143, %s24, 2
        %p145 = scmp.lt.s32.totalorder %s25, 0
        %s146 = scalar_select %p145, %s25, 0
        %s147 = sadd.s32 %s146, %s144
        %s148 = smul.addr %s147, 8
        %s149 = scalar_lea.vmem %s3, %s148
      $region24: #{_multilabel_ce.1} parent=15 // pred_fallthru
        _
    $region16: #{_multilabel_ce.1} parent=5 // pred_fallthru
      _
    %p150 = scmp.le.s32.totalorder 1, %s17
    %p151 = scmp.lt.s32.totalorder %s17, 4
    %p152 = pnand %p150, %p151
    %p153 = pneg %p152
    // Predicated region
    $region25: #{_multilabel_ce.1} parent=5 // pred_check
      _
    $region26: #{_multilabel_ce.1} parent=5 // pred_check_branch
      %155 = sbr.rel (%p152) target = $region28
    $region27: #{_multilabel_ce.1} parent=5 // pred_region
      %s156 = ssub.s32 %s17, 1
      %p157 = scmp.lt.s32.totalorder %s26, 2
      %s158 = scalar_select %p157, %s26, 2
      %p159 = scmp.lt.s32.totalorder %s27, 0
      %s160 = scalar_select %p159, %s27, 0
      %s161 = sadd.s32 %s160, %s158
      %s162 = smul.addr %s161, 8
      %s163 = scalar_lea.vmem %s2, %s162
      %p164 = pneg %p57
      %p165 = pneg %p54
      %p166 = scmp.lt.s32.totalorder %s26, 2
      %s167 = scalar_select %p166, %s26, 2
      %p168 = scmp.lt.s32.totalorder %s27, 0
      %s169 = scalar_select %p168, %s27, 0
      %s170 = sadd.s32 %s169, %s167
      %s171 = smul.addr %s170, 8
      %s172 = scalar_lea.vmem %s3, %s171
      %p173 = pneg %p85
      %p174 = pneg %p82
      %p175 = pneg %p111
      %p176 = pneg %p108
      %p177 = scmp.lt.s32.totalorder %s26, 2
      %s178 = scalar_select %p177, %s26, 2
      %s179 = scalar_lea.vmem %s4, %s178
      %p180 = scmp.lt.s32.totalorder %s26, 2
      %s181 = scalar_select %p180, %s26, 2
      %p182 = scmp.lt.s32.totalorder %s27, 0
      %s183 = scalar_select %p182, %s27, 0
      %s184 = sadd.s32 %s183, %s181
      %s185 = smul.addr %s184, 8
      %s186 = scalar_lea.vmem %s2, %s185
      %p187 = scmp.lt.s32.totalorder %s26, 2
      %s188 = scalar_select %p187, %s26, 2
      %p189 = scmp.lt.s32.totalorder %s27, 0
      %s190 = scalar_select %p189, %s27, 0
      %s191 = sadd.s32 %s190, %s188
      %s192 = smul.addr %s191, 8
      %s193 = scalar_lea.vmem %s3, %s192
      %p194 = scmp.lt.s32.totalorder %s26, 2
      %s195 = scalar_select %p194, %s26, 2
      %s196 = scalar_lea.vmem %s4, %s195
      %p197 = scmp.eq.s32.totalorder %s27, 0
      // Predicated region
      $region29: #{_multilabel_ce.1} parent=27 // pred_check
        %p198 = pneg %p197
      $region30: #{_multilabel_ce.1} parent=27 // pred_check_branch
        %200 = sbr.rel (%p198) target = $region32
      $region31: #{_multilabel_ce.1} parent=27 // pred_region
        %201 = vst [vmem:[#allocation2] sm:$0x3] 0.0
      $region32: #{_multilabel_ce.1} parent=27 // pred_fallthru
        _
      %v202 = vld [vmem:[%s186] sm:$0xff]
      %v203 = vld [vmem:[%s193] sm:$0xff]
      %s204 = smul.u32 %s27, 8
      %v205 = vlaneseq
      %v206 = vshrl.u32 %v205, 7
      %v207 = vlaneseq
      %v208 = vand.u32 %v207, 127
      %v209 = vstv %s204
      %v210 = vadd.s32 %v209, %v206
      %v211 = vmul.u32 %v210, 128
      %v212 = vadd.s32 %v211, %v208
      %s213 = sld [smem:[#allocation5]]
      %v214 = vstv %s213
      %vm215 = vcmp.lt.s32.totalorder %v212, %v214
      %s216 = sld [smem:[#allocation4 + %s26]]
      %vm217 = vcmp.eq.s32.totalorder %v203, 1
      %v218 = vstv %s216
      %v219 = vsel %vm217, %v218, 1.0
      %v220 = vsel %vm215, %v219, 0.0
      %v221 = vsub.f32 0.0, %v202
      %v222 = vsel %vm217, %v221, %v202
      %v223 = vmax.f32 %v222, 0.0
      %v224 = vand.u32 2147483647, %v222
      %v225 = vsub.f32 0.0, %v224
      %v226 = vmul.f32 %v225, 1.442695
      %v227 = vpow.pop %v226
      %v228 = vadd.f32 %v227, 1.0
      %v229 = vlog2.pop %v228
      %v230 = vmul.f32 %v229, 0.6931472
      %v231 = vadd.f32 %v223, %v230
      %v232 = vld [vmem:[#allocation2] sm:$0x1]
      %v233 = vmul.f32 %v220, %v231
      %v234 = vrot.slane %v233, 4
      %v235 = vadd.f32 %v233, %v234
      %v236 = vrot.slane %v235, 2
      %v237 = vadd.f32 %v235, %v236
      %v238 = vrot.slane %v237, 1
      %v239 = vadd.f32 %v237, %v238
      %v240 = vadd.f32 %v232, %v239
      %241 = vst [vmem:[#allocation2] sm:$0x1] %v240
      %v242 = vld [vmem:[#allocation2 + $0x1] sm:$0x1]
      %v243 = vrot.slane %v220, 4
      %v244 = vadd.f32 %v220, %v243
      %v245 = vrot.slane %v244, 2
      %v246 = vadd.f32 %v244, %v245
      %v247 = vrot.slane %v246, 1
      %v248 = vadd.f32 %v246, %v247
      %v249 = vadd.f32 %v242, %v248
      %250 = vst [vmem:[#allocation2 + $0x1] sm:$0x1] %v249
      // Predicated region
      $region33: #{_multilabel_ce.1} parent=27 // pred_check
        %p251 = pneg %p197
      $region34: #{_multilabel_ce.1} parent=27 // pred_check_branch
        %253 = sbr.rel (%p251) target = $region36
      $region35: #{_multilabel_ce.1} parent=27 // pred_region
        %v254 = vld [vmem:[#allocation2] sm:$0x1]
        %vm255 = vcmask 1040384
        %v256 = vsel %vm255, %v254, 0.0
        %257 = vadd.xlane.f32.xlu0 %v256
        %v258 = vpop.xlane.xlu0 %257
        %v259 = vrot.slane %v258, 4
        %v260 = vadd.f32 %v258, %v259
        %v261 = vrot.slane %v260, 2
        %v262 = vadd.f32 %v260, %v261
        %v263 = vrot.slane %v262, 1
        %v264 = vadd.f32 %v262, %v263
        %s265 = vtos %v264
        %v266 = vld [vmem:[#allocation2 + $0x1] sm:$0x1]
        %v267 = vsel %vm255, %v266, 0.0
        %268 = vadd.xlane.f32.xlu0 %v267
        %v269 = vpop.xlane.xlu0 %268
        %v270 = vrot.slane %v269, 4
        %v271 = vadd.f32 %v269, %v270
        %v272 = vrot.slane %v271, 2
        %v273 = vadd.f32 %v271, %v272
        %v274 = vrot.slane %v273, 1
        %v275 = vadd.f32 %v273, %v274
        %s276 = vtos %v275
        %v277 = vstv %s276
        %v278 = vrcp.pop %v277
        %s279 = vtos %v278
        %s280 = smul.f32 %s265, %s279
        %v281 = vstv %s280
        %282 = vst [vmem:[%s196] sm:$0x1] %v281
      $region36: #{_multilabel_ce.1} parent=27 // pred_fallthru
        _
      %p283 = scmp.lt.s32.totalorder %s26, 2
      %s284 = scalar_select %p283, %s26, 2
      %s285 = scalar_lea.vmem %s4, %s284
      // Predicated region
      $region37: #{_multilabel_ce.1} parent=27 // pred_check
        %p286 = pneg %p108
      $region38: #{_multilabel_ce.1} parent=27 // pred_check_branch
        %288 = sbr.rel (%p286) target = $region40
      $region39: #{_multilabel_ce.1} parent=27 // pred_region
        _
      $region40: #{_multilabel_ce.1} parent=27 // pred_fallthru
        _
    $region28: #{_multilabel_ce.1} parent=5 // pred_fallthru
      _
    %p289 = scmp.le.s32.totalorder 2, %s17
    // Predicated region
    $region41: #{_multilabel_ce.1} parent=5 // pred_check
      %p290 = pneg %p289
    $region42: #{_multilabel_ce.1} parent=5 // pred_check_branch
      %292 = sbr.rel (%p290) target = $region44
    $region43: #{_multilabel_ce.1} parent=5 // pred_region
      %s293 = ssub.s32 %s17, 2
      // Predicated region
      $region45: #{_multilabel_ce.1} parent=43 // pred_check
        %p294 = pneg %p114
      $region46: #{_multilabel_ce.1} parent=43 // pred_check_branch
        %296 = sbr.rel (%p294) target = $region48
      $region47: #{_multilabel_ce.1} parent=43 // pred_region
        %p297 = scmp.lt.s32.totalorder %s28, 2
        %s298 = scalar_select %p297, %s28, 2
        %s299 = scalar_lea.vmem %s4, %s298
      $region48: #{_multilabel_ce.1} parent=43 // pred_fallthru
        _
    $region44: #{_multilabel_ce.1} parent=5 // pred_fallthru
      _
  $region6: #{_multilabel_ce.1} parent=0 // loop_footer
    %s21 = sadd.s32 1, %s17
  $region7: #{_multilabel_ce.1} parent=0 // loop_footer_branch
    %16 = sbr.rel target = $region3
  $region8: #{_multilabel_ce.1} parent=0 // loop_exit
    _

</llo_original>
